<compile_context>
chip_gen: v7x
topology: tpu7x:2x2x1
jax: 0.10.0
libtpu: 0.0.40
codegen_flags: <defaults>
</compile_context>

<pallas_src>
import functools
import math

import jax
import jax.numpy as jnp
from jax.experimental import pallas as pl
from jax.experimental.pallas import tpu as pltpu


def _round_up(x, m):
    return ((x + m - 1) // m) * m


def _pick_tile(dim, cap, align):
    """Tile size (multiple of `align`, <= cap) minimizing round_up(dim, tile).

    Prefers the largest tile with zero extra padding beyond `align`-alignment;
    falls back to `cap` if that tile would be degenerately small.
    """
    cap = max(align, (int(cap) // align) * align)
    d_aligned = _round_up(dim, align)
    if d_aligned <= cap:
        return d_aligned                      # one tile along this axis
    best = align
    for t in range(align, cap + 1, align):
        if d_aligned % t == 0:
            best = t                          # largest zero-extra-padding divisor
    if best * 4 < cap:                        # too small -> prefer fewer, larger tiles
        best = cap
    return best


def _choose_tiling(T, U, Hp, Vp, mxu_isz, out_isz, u_align,
                   tile_t_cap, tile_u_cap, vmem_limit):
    """VMEM-budget-aware (tT, tU) selection + chunking for the joiner kernel."""
    # wo + bo: constant index_map (DMAed once) but conservatively counted as
    # double-buffered so the budget can never be exceeded by the pipeline.
    fixed = 2 * Hp * Vp * mxu_isz + 2 * Vp * 4

    tu_cap = max(u_align, tile_u_cap)
    while True:
        tU = _pick_tile(U, tu_cap, u_align)
        Up = _round_up(U, tU)
        # Keep the whole (Up, Hp) target projection resident per batch when
        # cheap: avoids re-DMAing each tp tile Tp/tT times.
        tp_resident = 2 * Up * Hp * 4 <= vmem_limit // 4
        tp_bytes = 2 * (Up if tp_resident else tU) * Hp * 4
        # In-kernel intermediates: <=2 chunks live (unroll=2) of the
        # (chunk_rows, Hp) join and (chunk_rows, Vp) f32 logits, plus slack.
        chunk_rows = max(256, 8 * tU)
        reserve = 2 * chunk_rows * (Hp + Vp) * 4 + (4 << 20)
        avail = vmem_limit - fixed - tp_bytes - reserve
        per_t_row = 2 * tU * Vp * out_isz + 2 * Hp * 4   # out + sp double buffers
        t_cap = avail // per_t_row
        if t_cap >= 8 or tu_cap <= u_align:
            break
        tu_cap = max(u_align, ((tu_cap // 2) // u_align) * u_align)

    tT = _pick_tile(T, max(8, min(tile_t_cap, t_cap)), 8)
    Tp = _round_up(T, tT)

    # Largest divisor of tT (multiple of 8) keeping ~<=256 flattened rows live.
    chunk_t = 8
    for d in range(tT, 7, -8):
        if tT % d == 0 and d * tU <= 256:
            chunk_t = d
            break
    return tT, tU, Tp, Up, tp_resident, chunk_t


# ---------------------------------------------------------------------------
# Projection kernel: out = x @ w + b   (row-tiled, per-batch, f32)
# ---------------------------------------------------------------------------
def proj_kernel(x_ref, w_ref, b_ref, out_ref):
    # x: (1, tR, E) f32, w: (E, Hp) f32, b: (1, Hp) f32, out: (1, tR, Hp) f32
    out_ref[0] = jnp.dot(x_ref[0], w_ref[...],
                         preferred_element_type=jnp.float32) + b_ref[...]


def _project(x, w, b, tile_rows, vmem_limit):
    """x: (B, Rp, E) f32, w: (E, Hp), b: (1, Hp) -> (B, Rp, Hp) f32."""
    B, Rp, E = x.shape
    Hp = w.shape[1]
    return pl.pallas_call(
        proj_kernel,
        out_shape=jax.ShapeDtypeStruct((B, Rp, Hp), jnp.float32),
        grid_spec=pltpu.PrefetchScalarGridSpec(
            num_scalar_prefetch=0,
            grid=(B, Rp // tile_rows),
            in_specs=[
                pl.BlockSpec((1, tile_rows, E), lambda b, r: (b, r, 0)),
                pl.BlockSpec((E, Hp), lambda b, r: (0, 0)),
                pl.BlockSpec((1, Hp), lambda b, r: (0, 0)),
            ],
            out_specs=pl.BlockSpec((1, tile_rows, Hp), lambda b, r: (b, r, 0)),
        ),
        compiler_params=pltpu.CompilerParams(
            dimension_semantics=("parallel", "parallel"),
            vmem_limit_bytes=vmem_limit),
    )(x, w, b)


# ---------------------------------------------------------------------------
# Joiner kernel: out[b, t, u, :] = tanh(sp[b,t,:] + tp[b,u,:]) @ wo + bo
# One grid step handles a (tT, tU) tile of a single batch element.
# ---------------------------------------------------------------------------
def joiner_kernel(sp_ref, tp_ref, wo_ref, bo_ref, out_ref, *,
                  chunk_t, tile_u, tp_resident, act_dtype):
    # sp: (1, tT, Hp) f32
    # tp: (1, Up, Hp) f32 if tp_resident else (1, tU, Hp) f32
    # wo: (Hp, Vp) mxu_dtype, bo: (1, Vp) f32, out: (1, tT, tU, Vp) out_dtype
    tT = sp_ref.shape[1]

    if tp_resident and tp_ref.shape[1] != tile_u:
        # Full-U block resident per batch: slice this grid step's U tile.
        u0 = pl.multiple_of(pl.program_id(2) * tile_u, tile_u)
        tp = tp_ref[0, pl.ds(u0, tile_u), :]
    else:
        tp = tp_ref[0]                                       # (tU, Hp)
    tp = tp.astype(act_dtype)            # hoisted cast (no-op for f32)

    wo = wo_ref[...]                     # (Hp, Vp), resident across the tile
    bo = bo_ref[...]                     # (1, Vp) f32

    n_chunks = tT // chunk_t

    def body(i, carry):
        r0 = pl.multiple_of(i * chunk_t, chunk_t)
        sp_c = sp_ref[0, pl.ds(r0, chunk_t), :].astype(act_dtype)     # (cT, Hp)
        # broadcast-add (VPU) + tanh (EUP) in act_dtype (bf16 on v6e/v7x)
        join = jnp.tanh(sp_c[:, None, :] + tp[None, :, :])            # (cT, tU, Hp)
        flat = join.reshape(chunk_t * tile_u, -1)      # free view (Hp % 128 == 0)
        if flat.dtype != wo.dtype:
            flat = flat.astype(wo.dtype)
        logits = jnp.dot(flat, wo, preferred_element_type=jnp.float32) + bo
        out_ref[0, pl.ds(r0, chunk_t)] = (
            logits.reshape(chunk_t, tile_u, -1).astype(out_ref.dtype))
        return carry

    jax.lax.fori_loop(0, n_chunks, body, 0, unroll=min(2, n_chunks))


# ---------------------------------------------------------------------------
# Wrapper
# ---------------------------------------------------------------------------
def simple_joiner(src_feats, tgt_feats, params, *,
                  mxu_dtype=jnp.bfloat16,      # MXU boundary dtype (f32 = slow/exact path)
                  act_dtype=None,              # tanh/add dtype (None -> mxu_dtype; use f32 on v5e)
                  out_dtype=None,              # logits storage dtype (None -> mxu_dtype)
                  tile_t_cap=256, tile_u_cap=64,
                  vmem_limit_bytes=48 * 1024 * 1024):
    """src_feats: (T, B, E_enc); tgt_feats: (B, U, E_dec). Returns (B, T, U, V).

    Defaults use bf16 for the MXU boundary, the tanh activation and the stored
    logits (accumulation stays f32) -- the fast path on v5e/v6e/v7x.  Pass
    mxu_dtype=jnp.float32 for a fully f32 (exact, ~3-4x slower) path, and
    act_dtype=jnp.float32 on v5e (no bf16 VPU/EUP).  The default 48 MiB VMEM
    budget is safe on v7x's 64 MiB VMEM; raise vmem_limit_bytes to ~100 MiB on
    v5e/v6e for larger tiles / fewer grid steps.
    """
    T, B, E = src_feats.shape
    Bt, U, D = tgt_feats.shape
    assert Bt == B

    act_dtype = mxu_dtype if act_dtype is None else act_dtype
    out_dtype = mxu_dtype if out_dtype is None else out_dtype
    mxu_isz = jnp.dtype(mxu_dtype).itemsize
    out_isz = jnp.dtype(out_dtype).itemsize

    ws, bs, wt, wo, bo = params
    H = ws.shape[1]
    V = wo.shape[1]

    # lane-dense, 128-multiple H/V (padded V lanes stay exactly 0; sliced off).
    Hp = _round_up(H, 128)
    Vp = _round_up(V, 128)
    # sub-32-bit output blocks want a 16-aligned sublane (second-to-last) dim.
    u_align = 16 if out_isz < 4 else 8

    tT, tU, Tp, Up, tp_resident, chunk_t = _choose_tiling(
        T, U, Hp, Vp, mxu_isz, out_isz, u_align,
        tile_t_cap, tile_u_cap, vmem_limit_bytes)

    # ---- glue: layout + zero-padding (padded H/V lanes stay exactly 0) ----
    src_btE = jnp.transpose(src_feats, (1, 0, 2))                     # (B, T, E)
    src_p = jnp.pad(src_btE, ((0, 0), (0, Tp - T), (0, 0)))
    tgt_p = jnp.pad(tgt_feats, ((0, 0), (0, Up - U), (0, 0)))
    ws_p = jnp.pad(ws, ((0, 0), (0, Hp - H)))
    bs_p = jnp.pad(bs, (0, Hp - H)).reshape(1, Hp)
    wt_p = jnp.pad(wt, ((0, 0), (0, Hp - H)))
    wo_p = jnp.pad(wo, ((0, Hp - H), (0, Vp - V))).astype(mxu_dtype)
    bo_p = jnp.pad(bo, (0, Vp - V)).reshape(1, Vp)
    zero_bias = jnp.zeros((1, Hp), jnp.float32)

    # ---- hoisted projections (cheap, separate small f32 kernels) ----
    sp = _project(src_p, ws_p, bs_p, tT, vmem_limit_bytes)            # (B, Tp, Hp)
    tp = _project(tgt_p, wt_p, zero_bias, tU, vmem_limit_bytes)       # (B, Up, Hp)

    # ---- cost estimate for XLA scheduling around the kernel ----
    flops = int(2 * B * Tp * Up * Hp * Vp + 2 * B * Tp * Up * Hp)
    transcendentals = int(B * Tp * Up * Hp)
    bytes_accessed = int(4 * B * Tp * Hp + 4 * B * Up * Hp
                         + out_isz * B * Tp * Up * Vp
                         + mxu_isz * Hp * Vp + 4 * Vp)

    if tp_resident:
        tp_spec = pl.BlockSpec((1, Up, Hp), lambda b, i, j: (b, 0, 0))
    else:
        tp_spec = pl.BlockSpec((1, tU, Hp), lambda b, i, j: (b, j, 0))

    out = pl.pallas_call(
        functools.partial(joiner_kernel, chunk_t=chunk_t, tile_u=tU,
                          tp_resident=tp_resident, act_dtype=act_dtype),
        out_shape=jax.ShapeDtypeStruct((B, Tp, Up, Vp), out_dtype),
        grid_spec=pltpu.PrefetchScalarGridSpec(
            num_scalar_prefetch=0,
            grid=(B, Tp // tT, Up // tU),
            in_specs=[
                pl.BlockSpec((1, tT, Hp), lambda b, i, j: (b, i, 0)),
                tp_spec,
                pl.BlockSpec((Hp, Vp), lambda b, i, j: (0, 0)),   # resident weights
                pl.BlockSpec((1, Vp), lambda b, i, j: (0, 0)),    # resident bias
            ],
            out_specs=pl.BlockSpec((1, tT, tU, Vp), lambda b, i, j: (b, i, j, 0)),
        ),
        compiler_params=pltpu.CompilerParams(
            dimension_semantics=("parallel", "parallel", "parallel"),
            vmem_limit_bytes=vmem_limit_bytes),
        cost_estimate=pl.CostEstimate(flops=flops,
                                      transcendentals=transcendentals,
                                      bytes_accessed=bytes_accessed),
    )(sp, tp, wo_p, bo_p)

    return out[:, :T, :U, :V]


# ---------------------------------------------------------------------------
# Parameter init (matches the PyTorch module) + pure-JAX reference
# ---------------------------------------------------------------------------
def _xavier_uniform(key, shape_in_out, gain):
    fan_in, fan_out = shape_in_out
    bound = gain * math.sqrt(6.0 / (fan_in + fan_out))
    return jax.random.uniform(key, (fan_in, fan_out), jnp.float32, -bound, bound)


def init_params(key, enc_dim, dec_dim, hidden_dim, vocab, enc_layers, dec_layers):
    k = jax.random.split(key, 5)
    ws = _xavier_uniform(k[0], (enc_dim, hidden_dim), (enc_layers + 1) ** (-0.5))  # (E, H)
    bs_bound = 1.0 / math.sqrt(enc_dim)
    bs = jax.random.uniform(k[1], (hidden_dim,), jnp.float32, -bs_bound, bs_bound)
    wt = _xavier_uniform(k[2], (dec_dim, hidden_dim), (dec_layers + 1) ** (-0.5))  # (D, H)
    wo_bound = 1.0 / math.sqrt(hidden_dim)
    wo = jax.random.uniform(k[3], (hidden_dim, vocab), jnp.float32, -wo_bound, wo_bound)
    bo = jax.random.uniform(k[4], (vocab,), jnp.float32, -wo_bound, wo_bound)
    return (ws, bs, wt, wo, bo)


def joiner_ref(src_feats, tgt_feats, params):
    ws, bs, wt, wo, bo = params
    sp = jnp.einsum("tbe,eh->tbh", src_feats, ws) + bs               # (T, B, H)
    sp = jnp.transpose(sp, (1, 0, 2))[:, :, None, :]                 # (B, T, 1, H)
    tp = jnp.einsum("bud,dh->buh", tgt_feats, wt)[:, None, :, :]     # (B, 1, U, H)
    join = jnp.tanh(sp + tp)                                         # (B, T, U, H)
    return jnp.einsum("btuh,hv->btuv", join, wo) + bo                # (B, T, U, V)


if __name__ == "__main__":
    # small args: encoder_embed_dim=32, decoder_embed_dim=32,
    #             encoder_layers=2, decoder_layers=2, vocab=16
    E_ENC, E_DEC, HID, V = 32, 32, 32, 16
    T, B, U = 8, 2, 6

    key = jax.random.PRNGKey(0)
    k_src, k_tgt, k_par = jax.random.split(key, 3)
    src_feats = jax.random.normal(k_src, (T, B, E_ENC), jnp.float32)
    tgt_feats = jax.random.normal(k_tgt, (B, U, E_DEC), jnp.float32)
    params = init_params(k_par, E_ENC, E_DEC, HID, V, enc_layers=2, dec_layers=2)

    ref = joiner_ref(src_feats, tgt_feats, params)

    # Default fast path: bf16 MXU + bf16 tanh + bf16 logits (f32 accumulation).
    logits = jax.block_until_ready(simple_joiner(src_feats, tgt_feats, params))
    assert logits.shape == (B, T, U, V)
    assert logits.dtype == jnp.bfloat16
    assert jnp.allclose(logits.astype(jnp.float32), ref, atol=1e-1, rtol=1e-1)

    # Full-f32 path (exact configuration, tight tolerance).
    logits_f32 = jax.block_until_ready(
        simple_joiner(src_feats, tgt_feats, params, mxu_dtype=jnp.float32))
    assert logits_f32.shape == (B, T, U, V)
    assert logits_f32.dtype == jnp.float32
    assert jnp.allclose(logits_f32, ref, atol=1e-5, rtol=1e-5)

    print("KERNEL_OK")
</pallas_src>

<mosaic_0001>
module attributes {stable_mosaic.version = 11 : i64} {
  func.func @proj_kernel(%arg0: i32, %arg1: i32, %arg2: memref<1x8x32xf32, #tpu.memory_space<vmem>>, %arg3: memref<32x128xf32, #tpu.memory_space<vmem>>, %arg4: memref<1x128xf32, #tpu.memory_space<vmem>>, %arg5: memref<1x8x128xf32, #tpu.memory_space<vmem>>) attributes {dimension_semantics = [#tpu.dimension_semantics<parallel>, #tpu.dimension_semantics<parallel>], iteration_bounds = array<i64: 2, 1>, scalar_prefetch = 0 : i64, scratch_operands = 0 : i64, tpu.core_type = #tpu.core_type<tc>, window_params = [{transform_indices = @transform_0, window_bounds = array<i64: 1, 8, 32>}, {pipeline_mode = #tpu.pipeline_mode<synchronous>, transform_indices = @transform_1, window_bounds = array<i64: 32, 128>}, {pipeline_mode = #tpu.pipeline_mode<synchronous>, transform_indices = @transform_2, window_bounds = array<i64: 1, 128>}, {transform_indices = @transform_3, window_bounds = array<i64: 1, 8, 128>}]} {
    %c0 = arith.constant 0 : index
    %c0_0 = arith.constant 0 : index
    %c0_1 = arith.constant 0 : index
    %0 = vector.load %arg2[%c0, %c0_0, %c0_1] : memref<1x8x32xf32, #tpu.memory_space<vmem>>, vector<1x8x32xf32>
    %1 = vector.shape_cast %0 : vector<1x8x32xf32> to vector<8x32xf32>
    %c0_2 = arith.constant 0 : index
    %c0_3 = arith.constant 0 : index
    %2 = vector.load %arg3[%c0_2, %c0_3] : memref<32x128xf32, #tpu.memory_space<vmem>>, vector<32x128xf32>
    %cst = arith.constant dense<0.000000e+00> : vector<8x128xf32>
    %3 = tpu.matmul %1, %2, %cst {dimension_numbers = #tpu.dot_dimension_numbers<[1], [0], [0], [1], [0, 0, 1, 1], [], []>} : vector<8x32xf32>, vector<32x128xf32>, vector<8x128xf32> -> vector<8x128xf32>
    %c0_4 = arith.constant 0 : index
    %c0_5 = arith.constant 0 : index
    %4 = vector.load %arg4[%c0_4, %c0_5] : memref<1x128xf32, #tpu.memory_space<vmem>>, vector<1x128xf32>
    %5 = vector.broadcast %4 : vector<1x128xf32> to vector<8x128xf32>
    %6 = arith.addf %3, %5 : vector<8x128xf32>
    %c0_6 = arith.constant 0 : index
    %c0_7 = arith.constant 0 : index
    %c0_8 = arith.constant 0 : index
    %7 = vector.load %arg5[%c0_6, %c0_7, %c0_8] : memref<1x8x128xf32, #tpu.memory_space<vmem>>, vector<1x8x128xf32>
    %8 = vector.shape_cast %7 : vector<1x8x128xf32> to vector<8x128xf32>
    %9 = vector.shape_cast %6 : vector<8x128xf32> to vector<1x8x128xf32>
    tpu.vector_store %arg5[%c0_6, %c0_7, %c0_8], %9 {strides = array<i32>} : memref<1x8x128xf32, #tpu.memory_space<vmem>>, vector<1x8x128xf32>,
    return
  }
  func.func @transform_0(%arg0: i32, %arg1: i32) -> (i32, i32, i32) {
    %c0_i32 = arith.constant 0 : i32
    %c0_i32_0 = arith.constant 0 : i32
    return %arg0, %arg1, %c0_i32 : i32, i32, i32
  }
  func.func @transform_1(%arg0: i32, %arg1: i32) -> (i32, i32) {
    %c0_i32 = arith.constant 0 : i32
    %c0_i32_0 = arith.constant 0 : i32
    %c0_i32_1 = arith.constant 0 : i32
    return %c0_i32, %c0_i32_0 : i32, i32
  }
  func.func @transform_2(%arg0: i32, %arg1: i32) -> (i32, i32) {
    %c0_i32 = arith.constant 0 : i32
    %c0_i32_0 = arith.constant 0 : i32
    %c0_i32_1 = arith.constant 0 : i32
    return %c0_i32, %c0_i32_0 : i32, i32
  }
  func.func @transform_3(%arg0: i32, %arg1: i32) -> (i32, i32, i32) {
    %c0_i32 = arith.constant 0 : i32
    %c0_i32_0 = arith.constant 0 : i32
    return %arg0, %arg1, %c0_i32 : i32, i32, i32
  }
}

</mosaic_0001>

<llo_original>
// kernel: tpu_custom_call.1
$region0: #{tpu_custom_call.1}
  #allocation0 [shape = 'u32[]', space=smem, size = 0x4, offset = 0x4, fixed_abs, tag = 'smem constant byte address 0x4 - core index']
  #allocation1 [shape = 'u32[144,128]{1,0:T(1,128)}', space=vmem, size = 0x12000, scoped, tag = 'internal scratch']
  %s0 = inlined_call_operand.hbm [shape: f32[2,8,32], index: 0, kind: input, shape index: {}]
  %s1 = inlined_call_operand.hbm [shape: f32[32,128], index: 1, kind: input, shape index: {}]
  %s2 = inlined_call_operand.vmem [shape: f32[1,128], index: 2, kind: input, shape index: {}]
  %s3 = inlined_call_operand.hbm [shape: f32[2,8,128], index: 3, kind: output, shape index: {}]
  %s4 = sld [smem:[#allocation0]]
  $region53: #{tpu_custom_call.1} parent=0
    _
  %s6 = ssub.s32 1, %s4
  %s7 = scalar_select 0, %s6, %s4
  $region1: #{tpu_custom_call.1} parent=0
    #allocation2 [shape = 'u8[8192]{0}', space=vmem, size = 0x2000, scoped, tag = 'input window, operand 0']
    #allocation3 [shape = 's32[2]{0}', space=sflag, size = 0x8, scoped, tag = 'scoped memory for tpu_custom_call.1']
    #allocation4 [shape = 's32[2]{0}', space=sflag, size = 0x8, scoped, tag = 'scoped memory for tpu_custom_call.1']
    #allocation5 [shape = 'u8[16384]{0}', space=vmem, size = 0x4000, scoped, tag = 'input window, operand 1, single buffered']
    #allocation6 [shape = 's32[1]{0}', space=sflag, size = 0x4, scoped, tag = 'scoped memory for tpu_custom_call.1']
    #allocation7 [shape = 'u8[8192]{0}', space=vmem, size = 0x2000, scoped, tag = 'output window, operand 0']
    %8 = vsyncpa [#allocation3], 0
    %s9 = scalar_lea.sflag [#allocation3], 1
    %10 = vsyncpa %s9, 0
    %11 = vsyncpa [#allocation6], 0
    %12 = vsyncpa [#allocation4], 0
    %s13 = scalar_lea.sflag [#allocation4], 1
    %14 = vsyncpa %s13, 0
    loop: start=0, step=1, limit=4
    $region2: #{tpu_custom_call.1} parent=1 // loop_pre_header
      _
    $region3: #{tpu_custom_call.1} parent=1 // loop_header
      %s16 = sphi 0, %s20
      %p17 = scmp.ge.s32.totalorder %s16, 4
      %s23 = sphi 0, %s35
      %s24 = sphi 0, %s31
      %s25 = sphi 0, %s23
      %s26 = sphi 0, %s24
      %s27 = sphi 0, %s25
      %s28 = sphi 0, %s26
      %s40 = sphi 0, %s42
      %s43 = sphi 0, %s40
      %s44 = sphi 0, %s43
      %s60 = sphi 0, %s44
      %s64 = sphi 0, %s64
      %s66 = sphi 0, %s64
      %s67 = sphi 0, %s66
      %s81 = sphi 0, %s67
      %s85 = sphi 0, %s85
      %s87 = sphi 0, %s85
      %s88 = sphi 0, %s87
      %s102 = sphi 0, %s88
      %s110 = sphi 0, %s112
      %s113 = sphi 0, %s110
      %s114 = sphi 0, %s113
      %s130 = sphi 0, %s114
    $region4: #{tpu_custom_call.1} parent=1 // loop_header_branch
      %19 = sbr.rel (%p17) target = $region8
    $region5: #{tpu_custom_call.1} parent=1 // loop_body
      %s21 = ssub.s32 %s16, 1
      %s22 = ssub.s32 %s16, 2
      %s29 = sadd.s32 1, %s24
      %p30 = scmp.ge.s32.totalorder %s29, 1
      %s31 = scalar_select %p30, 0, %s29
      %s32 = sadd.s32 1, %s23
      %s33 = scalar_select %p30, %s32, %s23
      %p34 = scmp.ge.s32.totalorder %s33, 2
      %s35 = scalar_select %p34, 0, %s33
      %s36 = ssub.s32 %s23, %s35
      %s37 = ssub.s32 %s24, %s31
      %s38 = sor.u32 %s36, %s37
      %p39 = scmp.eq.s32.totalorder %s38, 0
      %s41 = sadd.s32 %s40, 1
      %s42 = scalar_select %p39, %s40, %s41
      %p45 = pneg %p39
      %p46 = scmp.eq.s32.totalorder %s16, 1
      %p47 = por %p45, %p46
      %p48 = scmp.ne.s32.totalorder %s40, %s43
      %p49 = scmp.eq.s32.totalorder %s16, 0
      %p50 = por %p48, %p49
      %p51 = scmp.ne.s32.totalorder %s40, %s43
      %p52 = scmp.eq.s32.totalorder %s21, 1
      %p53 = por %p51, %p52
      %p54 = scmp.ne.s32.totalorder %s43, %s44
      %p55 = scmp.eq.s32.totalorder %s21, 0
      %p56 = por %p54, %p55
      %p57 = scmp.ne.s32.totalorder %s43, %s44
      %p58 = scmp.eq.s32.totalorder %s22, 1
      %p59 = por %p57, %p58
      %p61 = scmp.ne.s32.totalorder %s44, %s60
      %p62 = scmp.eq.s32.totalorder %s22, 0
      %p63 = por %p61, %p62
      %s65 = sadd.s32 %s64, 1
      %p68 = scmp.eq.s32.totalorder %s16, 1
      %p69 = scmp.ne.s32.totalorder %s64, %s66
      %p70 = scmp.eq.s32.totalorder %s16, 0
      %p71 = por %p69, %p70
      %p72 = scmp.ne.s32.totalorder %s64, %s66
      %p73 = scmp.eq.s32.totalorder %s21, 1
      %p74 = por %p72, %p73
      %p75 = scmp.ne.s32.totalorder %s66, %s67
      %p76 = scmp.eq.s32.totalorder %s21, 0
      %p77 = por %p75, %p76
      %p78 = scmp.ne.s32.totalorder %s66, %s67
      %p79 = scmp.eq.s32.totalorder %s22, 1
      %p80 = por %p78, %p79
      %p82 = scmp.ne.s32.totalorder %s67, %s81
      %p83 = scmp.eq.s32.totalorder %s22, 0
      %p84 = por %p82, %p83
      %s86 = sadd.s32 %s85, 1
      %p89 = scmp.eq.s32.totalorder %s16, 1
      %p90 = scmp.ne.s32.totalorder %s85, %s87
      %p91 = scmp.eq.s32.totalorder %s16, 0
      %p92 = por %p90, %p91
      %p93 = scmp.ne.s32.totalorder %s85, %s87
      %p94 = scmp.eq.s32.totalorder %s21, 1
      %p95 = por %p93, %p94
      %p96 = scmp.ne.s32.totalorder %s87, %s88
      %p97 = scmp.eq.s32.totalorder %s21, 0
      %p98 = por %p96, %p97
      %p99 = scmp.ne.s32.totalorder %s87, %s88
      %p100 = scmp.eq.s32.totalorder %s22, 1
      %p101 = por %p99, %p100
      %p103 = scmp.ne.s32.totalorder %s88, %s102
      %p104 = scmp.eq.s32.totalorder %s22, 0
      %p105 = por %p103, %p104
      %s106 = ssub.s32 %s23, %s35
      %s107 = ssub.s32 %s24, %s31
      %s108 = sor.u32 %s106, %s107
      %p109 = scmp.eq.s32.totalorder %s108, 0
      %s111 = sadd.s32 %s110, 1
      %s112 = scalar_select %p109, %s110, %s111
      %p115 = pneg %p109
      %p116 = scmp.eq.s32.totalorder %s16, 1
      %p117 = por %p115, %p116
      %p118 = scmp.ne.s32.totalorder %s110, %s113
      %p119 = scmp.eq.s32.totalorder %s16, 0
      %p120 = por %p118, %p119
      %p121 = scmp.ne.s32.totalorder %s110, %s113
      %p122 = scmp.eq.s32.totalorder %s21, 1
      %p123 = por %p121, %p122
      %p124 = scmp.ne.s32.totalorder %s113, %s114
      %p125 = scmp.eq.s32.totalorder %s21, 0
      %p126 = por %p124, %p125
      %p127 = scmp.ne.s32.totalorder %s113, %s114
      %p128 = scmp.eq.s32.totalorder %s22, 1
      %p129 = por %p127, %p128
      %p131 = scmp.ne.s32.totalorder %s114, %s130
      %p132 = scmp.eq.s32.totalorder %s22, 0
      %p133 = por %p131, %p132
      %p134 = scmp.le.s32.totalorder 1, %s16
      %p135 = scmp.lt.s32.totalorder %s16, 3
      %p136 = pnand %p134, %p135
      %p137 = pneg %p136
      // Predicated region
      $region9: #{tpu_custom_call.1} parent=5 // pred_check
        _
      $region10: #{tpu_custom_call.1} parent=5 // pred_check_branch
        %139 = sbr.rel (%p136) target = $region12
      $region11: #{tpu_custom_call.1} parent=5 // pred_region
        %s140 = ssub.s32 %s16, 1
        // Predicated region
        $region13: #{tpu_custom_call.1} parent=11 // pred_check
          %p141 = pneg %p77
        $region14: #{tpu_custom_call.1} parent=11 // pred_check_branch
          %143 = sbr.rel (%p141) target = $region16
        $region15: #{tpu_custom_call.1} parent=11 // pred_region
          %s145 = ssub.s32 512, 512
          %146 = vsyncadd [#allocation6], %s145
          %s147 = sshll.u32 [#allocation5], 4
          %s148 = int_to_ptr.vmem [resolvable:$true] %s147
          %153 = dma.hbm_to_vmem [thread:$0]  %s1, 512, %s148, [#allocation6], 128, 128, 8
        $region16: #{tpu_custom_call.1} parent=11 // pred_fallthru
          _
        // Predicated region
        $region17: #{tpu_custom_call.1} parent=11 // pred_check
          %p154 = pneg %p98
        $region18: #{tpu_custom_call.1} parent=11 // pred_check_branch
          %156 = sbr.rel (%p154) target = $region20
        $region19: #{tpu_custom_call.1} parent=11 // pred_region
          _
        $region20: #{tpu_custom_call.1} parent=11 // pred_fallthru
          _
      $region12: #{tpu_custom_call.1} parent=5 // pred_fallthru
        _
      %p157 = scmp.lt.s32.totalorder %s16, 2
      // Predicated region
      $region21: #{tpu_custom_call.1} parent=5 // pred_check
        %p158 = pneg %p157
      $region22: #{tpu_custom_call.1} parent=5 // pred_check_branch
        %160 = sbr.rel (%p158) target = $region24
      $region23: #{tpu_custom_call.1} parent=5 // pred_region
        // Predicated region
        $region25: #{tpu_custom_call.1} parent=23 // pred_check
          %p161 = pneg %p50
        $region26: #{tpu_custom_call.1} parent=23 // pred_check_branch
          %163 = sbr.rel (%p161) target = $region28
        $region27: #{tpu_custom_call.1} parent=23 // pred_region
          %s164 = sand.u32 %s40, 1
          %s165 = scalar_lea.sflag [#allocation3], %s164
          %s166 = sand.u32 %s40, 1
          %s167 = smul.addr %s166, 8
          %s168 = scalar_lea.vmem [#allocation2], %s167
          %s170 = ssub.s32 128, 128
          %171 = vsyncadd %s165, %s170
          %s172 = sadd.s32 %s24, %s23
          %s173 = smul.addr %s172, 128
          %s174 = scalar_lea.hbm %s0, %s173
          %s176 = sshll.u32 %s168, 4
          %s177 = int_to_ptr.vmem [resolvable:$true] %s176
          %179 = dma.hbm_to_vmem [thread:$0]  %s174, 128, %s177, %s165
        $region28: #{tpu_custom_call.1} parent=23 // pred_fallthru
          _
      $region24: #{tpu_custom_call.1} parent=5 // pred_fallthru
        _
      %p180 = scmp.le.s32.totalorder 1, %s16
      %p181 = scmp.lt.s32.totalorder %s16, 3
      %p182 = pnand %p180, %p181
      %p183 = pneg %p182
      // Predicated region
      $region29: #{tpu_custom_call.1} parent=5 // pred_check
        _
      $region30: #{tpu_custom_call.1} parent=5 // pred_check_branch
        %185 = sbr.rel (%p182) target = $region32
      $region31: #{tpu_custom_call.1} parent=5 // pred_region
        %s186 = ssub.s32 %s16, 1
        %s187 = sand.u32 %s43, 1
        %s188 = scalar_lea.sflag [#allocation3], %s187
        %s189 = sand.u32 %s43, 1
        %s190 = smul.addr %s189, 8
        %s191 = scalar_lea.vmem [#allocation2], %s190
        // Predicated region
        $region33: #{tpu_custom_call.1} parent=31 // pred_check
          %p192 = pneg %p56
        $region34: #{tpu_custom_call.1} parent=31 // pred_check_branch
          %194 = sbr.rel (%p192) target = $region36
        $region35: #{tpu_custom_call.1} parent=31 // pred_region
          %195 = dma.done %s188, 128
        $region36: #{tpu_custom_call.1} parent=31 // pred_fallthru
          _
        // Predicated region
        $region37: #{tpu_custom_call.1} parent=31 // pred_check
          %p196 = pneg %p77
        $region38: #{tpu_custom_call.1} parent=31 // pred_check_branch
          %198 = sbr.rel (%p196) target = $region40
        $region39: #{tpu_custom_call.1} parent=31 // pred_region
          %199 = dma.done [#allocation6], 512
        $region40: #{tpu_custom_call.1} parent=31 // pred_fallthru
          _
        %s200 = sand.u32 %s43, 1
        %s201 = scalar_lea.sflag [#allocation3], %s200
        %s202 = sand.u32 %s43, 1
        %s203 = smul.addr %s202, 8
        %s204 = scalar_lea.vmem [#allocation2], %s203
        %p205 = pneg %p56
        %p206 = pneg %p53
        %p207 = pneg %p77
        %p208 = pneg %p74
        %p209 = pneg %p98
        %p210 = pneg %p95
        %p211 = pneg %p126
        %p212 = pneg %p123
        %s213 = sand.u32 %s113, 1
        %s214 = scalar_lea.sflag [#allocation4], %s213
        %s215 = sand.u32 %s113, 1
        %s216 = smul.addr %s215, 8
        %s217 = scalar_lea.vmem [#allocation7], %s216
        %v218 = vld [vmem:[%s191] sm:$0xff]
        %v219 = vld [vmem:[#allocation5] sm:$0xff]
        %v220 = vld [vmem:[#allocation5 + $0x8] sm:$0xff]
        %v221 = vld [vmem:[#allocation5 + $0x10] sm:$0xff]
        %v222 = vld [vmem:[#allocation5 + $0x18] sm:$0xff]
        %v223 = vld [vmem:[%s2] sm:$0x1]
        %v225 = vlaneseq
        %v226 = vshrl.u32 %v225, 7
        %v227 = vsub.s32 0, %v226
        %v228 = vrot.slane %v223, %v227
        %vm230 = vcmask 261120
        %v232 = vsel %vm230, %v218, 0
        %234 = vmatprep.subr.mxu0 0.0
        %235 = vmatpush1.msra.mxu0 %v219
        %236 = vmatprep.subr.mxu0 0.0
        %237 = vmatpush1.msra.mxu0 %v220
        %238 = vmatprep.subr.mxu0 0.0
        %239 = vmatpush1.msra.mxu0 %v221
        %240 = vmatprep.subr.mxu0 0.0
        %241 = vmatpush1.msra.mxu0 %v222
        %242 = vmatprep.subr.mxu0 0.0
        %243 = vmatpush1.msra.mxu0 0.0
        %244 = vmatprep.subr.mxu0 0.0
        %245 = vmatpush1.msra.mxu0 0.0
        %246 = vmatprep.subr.mxu0 0.0
        %247 = vmatpush1.msra.mxu0 0.0
        %248 = vmatprep.subr.mxu0 0.0
        %249 = vmatpush1.msra.mxu0 0.0
        %250 = vmatprep.subr.mxu0 0.0
        %251 = vmatpush1.msra.mxu0 0.0
        %252 = vmatprep.subr.mxu0 0.0
        %253 = vmatpush1.msra.mxu0 0.0
        %254 = vmatprep.subr.mxu0 0.0
        %255 = vmatpush1.msra.mxu0 0.0
        %256 = vmatprep.subr.mxu0 0.0
        %257 = vmatpush1.msra.mxu0 0.0
        %258 = vmatprep.subr.mxu0 0.0
        %259 = vmatpush1.msra.mxu0 0.0
        %260 = vmatprep.subr.mxu0 0.0
        %261 = vmatpush1.msra.mxu0 0.0
        %262 = vmatprep.subr.mxu0 0.0
        %263 = vmatpush1.msra.mxu0 0.0
        %264 = vmatprep.subr.mxu0 0.0
        %265 = vmatpush1.msra.mxu0 0.0
        %266 = vmatprep.subr.mxu0 0.0
        %267 = vmatpush1.msra.mxu0 0.0
        %268 = vmatprep.subr.mxu0 0.0
        %269 = vmatpush1.msra.mxu0 0.0
        %270 = vmatprep.subr.mxu0 0.0
        %271 = vmatpush1.msra.mxu0 0.0
        %272 = vmatprep.subr.mxu0 0.0
        %273 = vmatpush1.msra.mxu0 0.0
        %274 = vmatprep.subr.mxu0 0.0
        %275 = vmatpush1.msra.mxu0 0.0
        %276 = vmatprep.subr.mxu0 0.0
        %277 = vmatpush1.msra.mxu0 0.0
        %278 = vmatprep.subr.mxu0 0.0
        %279 = vmatpush1.msra.mxu0 0.0
        %280 = vmatprep.subr.mxu0 0.0
        %281 = vmatpush1.msra.mxu0 0.0
        %282 = vmatprep.subr.mxu0 0.0
        %283 = vmatpush1.msra.mxu0 0.0
        %284 = vmatprep.subr.mxu0 0.0
        %285 = vmatpush1.msra.mxu0 0.0
        %286 = vmatprep.subr.mxu0 0.0
        %287 = vmatpush1.msra.mxu0 0.0
        %288 = vmatprep.subr.mxu0 0.0
        %289 = vmatpush1.msra.mxu0 0.0
        %290 = vmatprep.subr.mxu0 0.0
        %291 = vmatpush1.msra.mxu0 0.0
        %292 = vmatprep.subr.mxu0 0.0
        %293 = vmatpush1.msra.mxu0 0.0
        %294 = vmatprep.subr.mxu0 0.0
        %295 = vmatpush1.msra.mxu0 0.0
        %296 = vmatprep.subr.mxu0 0.0
        %297 = vmatpush1.msra.mxu0 0.0
        %298 = vmatprep.mubr.f32.mxu0 0.0
        %299 = vmatmul.mubr.f32.gmra.mrb[0].mxu0 %v232
        %v300 = vpop.f32.mrb[0].mxu0
        %v301 = vadd.f32 %v228, %v300
        %v302 = vpop.f32.mrb[0].mxu0
        %303 = vdwg.mxu0
        %304 = vst [vmem:[%s217] sm:$0xff] %v301
        %s305 = sand.u32 %s113, 1
        %s306 = scalar_lea.sflag [#allocation4], %s305
        %s307 = sand.u32 %s113, 1
        %s308 = smul.addr %s307, 8
        %s309 = scalar_lea.vmem [#allocation7], %s308
        // Predicated region
        $region41: #{tpu_custom_call.1} parent=31 // pred_check
          %p310 = pneg %p123
        $region42: #{tpu_custom_call.1} parent=31 // pred_check_branch
          %312 = sbr.rel (%p310) target = $region44
        $region43: #{tpu_custom_call.1} parent=31 // pred_region
          %s314 = ssub.s32 128, 128
          %315 = vsyncadd %s306, %s314
          %s316 = sadd.s32 %s26, %s25
          %s317 = smul.addr %s316, 128
          %s318 = scalar_lea.hbm %s3, %s317
          %s320 = sshll.u32 %s309, 4
          %s321 = int_to_ptr.vmem [resolvable:$true] %s320
          %323 = dma.vmem_to_hbm [thread:$0]  %s321, 128, %s318, %s306
        $region44: #{tpu_custom_call.1} parent=31 // pred_fallthru
          _
      $region32: #{tpu_custom_call.1} parent=5 // pred_fallthru
        _
      %p324 = scmp.le.s32.totalorder 2, %s16
      // Predicated region
      $region45: #{tpu_custom_call.1} parent=5 // pred_check
        %p325 = pneg %p324
      $region46: #{tpu_custom_call.1} parent=5 // pred_check_branch
        %327 = sbr.rel (%p325) target = $region48
      $region47: #{tpu_custom_call.1} parent=5 // pred_region
        %s328 = ssub.s32 %s16, 2
        // Predicated region
        $region49: #{tpu_custom_call.1} parent=47 // pred_check
          %p329 = pneg %p129
        $region50: #{tpu_custom_call.1} parent=47 // pred_check_branch
          %331 = sbr.rel (%p329) target = $region52
        $region51: #{tpu_custom_call.1} parent=47 // pred_region
          %s332 = sand.u32 %s114, 1
          %s333 = scalar_lea.sflag [#allocation4], %s332
          %s334 = sand.u32 %s114, 1
          %s335 = smul.addr %s334, 8
          %s336 = scalar_lea.vmem [#allocation7], %s335
          %337 = dma.done %s333, 128
        $region52: #{tpu_custom_call.1} parent=47 // pred_fallthru
          _
      $region48: #{tpu_custom_call.1} parent=5 // pred_fallthru
        _
    $region6: #{tpu_custom_call.1} parent=1 // loop_footer
      %s20 = sadd.s32 1, %s16
    $region7: #{tpu_custom_call.1} parent=1 // loop_footer_branch
      %15 = sbr.rel target = $region3
    $region8: #{tpu_custom_call.1} parent=1 // loop_exit
      _
    %338 = vsyncpa [#allocation3], 1
    %s339 = scalar_lea.sflag [#allocation3], 1
    %340 = vsyncpa %s339, 1
    %341 = vsyncpa [#allocation6], 1
    %342 = vsyncpa [#allocation4], 1
    %s343 = scalar_lea.sflag [#allocation4], 1
    %344 = vsyncpa %s343, 1

</llo_original>
